<compile_context>
chip_gen: v6e
topology: v6e:2x2x1
jax: 0.10.0
libtpu: 0.0.40
codegen_flags: <defaults>
</compile_context>

<pallas_src>
import functools

import jax
import jax.numpy as jnp
from jax.experimental import pallas as pl
from jax.experimental.pallas import tpu as pltpu


def adapter_kernel(x_ref, w1_ref, b1_ref, w2_ref, b2_ref, o_ref):
    # x_ref: (TM, Dp)   w1_ref: (Dp, Hp)   b1_ref: (1, Hp)
    # w2_ref: (Hp, Dp)  b2_ref: (1, Dp)    o_ref: (TM, Dp)
    x = x_ref[...]  # native dtype into the MXU; accumulate in f32

    # linear1 + ReLU  (dropout == identity at inference)
    h = jnp.dot(x, w1_ref[...], preferred_element_type=jnp.float32)
    h = jnp.maximum(h + b1_ref[...].astype(jnp.float32), 0.0)

    # linear2
    u = jnp.dot(h.astype(w2_ref.dtype), w2_ref[...],
                preferred_element_type=jnp.float32)
    u = u + b2_ref[...].astype(jnp.float32)

    # residual in f32, cast only at the store
    o_ref[...] = (x.astype(jnp.float32) + u).astype(o_ref.dtype)


def _round_up(n, m):
    return ((n + m - 1) // m) * m


@functools.partial(jax.jit, static_argnames=("tile_m",))
def adapter_block(x, w1, b1, w2, b2, *, tile_m=None):
    """x: (B, S, D).  w1: (D, H), b1: (H,), w2: (H, D), b2: (D,).

    tile_m (optional, static): max packed rows per grid step; None = auto
    (~1 MiB per input block).
    """
    B, S, D = x.shape
    H = w1.shape[1]
    N = B * S

    # --- Lane-packing factor -------------------------------------------------
    # Pack P tokens per row so the last dim approaches 128 lanes.  P must
    # divide N (so the reshape is free) -- fall back to smaller powers of two
    # rather than padding (pad + slice would cost two extra HBM round trips).
    P = 1
    if D <= 128 and 128 % D == 0:
        cand = 128 // D
        while cand > 1 and (N % cand) != 0:
            cand //= 2
        P = max(cand, 1)
    Dp, Hp = P * D, P * H
    Np = N // P

    xp = x.reshape(Np, Dp)  # free, bitwise row-major reshape

    # Block-diagonal weights so packed tokens are transformed independently.
    if P > 1:
        w1p = jnp.kron(jnp.eye(P, dtype=w1.dtype), w1)   # (Dp, Hp)
        w2p = jnp.kron(jnp.eye(P, dtype=w2.dtype), w2)   # (Hp, Dp)
        b1p = jnp.tile(b1, P).reshape(1, Hp)
        b2p = jnp.tile(b2, P).reshape(1, Dp)
    else:
        w1p, w2p = w1, w2
        b1p, b2p = b1.reshape(1, H), b2.reshape(1, D)

    # --- Tile selection ------------------------------------------------------
    # Target ~1 MiB of payload per input block to amortize the ~0.35 us
    # per-grid-step overhead; single full-array block when the input is small
    # (a block equal to the full array dims is always layout-legal).
    itemsize = jnp.dtype(x.dtype).itemsize
    if tile_m is None:
        tm_cap = max(1024, (1 << 20) // (Dp * itemsize))
    else:
        tm_cap = tile_m
    if Np <= tm_cap:
        tm = Np                       # single block == full array dims
    else:
        tm = _round_up(tm_cap, 8)     # sublane-aligned multi-step tile

    grid = (pl.cdiv(Np, tm),)         # trailing partial block is masked

    out = pl.pallas_call(
        adapter_kernel,
        out_shape=jax.ShapeDtypeStruct((Np, Dp), x.dtype),
        grid_spec=pltpu.PrefetchScalarGridSpec(
            num_scalar_prefetch=0,
            grid=grid,
            in_specs=[
                pl.BlockSpec((tm, Dp), lambda i: (i, 0)),   # x tile (pipelined)
                pl.BlockSpec((Dp, Hp), lambda i: (0, 0)),   # w1 (resident)
                pl.BlockSpec((1, Hp), lambda i: (0, 0)),    # b1
                pl.BlockSpec((Hp, Dp), lambda i: (0, 0)),   # w2
                pl.BlockSpec((1, Dp), lambda i: (0, 0)),    # b2
            ],
            out_specs=pl.BlockSpec((tm, Dp), lambda i: (i, 0)),
        ),
        compiler_params=pltpu.CompilerParams(
            dimension_semantics=("parallel",),
        ),
    )(xp, w1p, b1p, w2p, b2p)

    return out.reshape(B, S, D)


def reference(x, w1, b1, w2, b2):
    h = jnp.maximum(x @ w1 + b1, 0.0)
    u = h @ w2 + b2
    return x + u


if __name__ == "__main__":
    # Small shapes consistent with the module's forward.
    batch, seq, input_dim, adapter_hidden_dim = 2, 8, 32, 16

    key = jax.random.PRNGKey(0)
    kx, kw1, kw2 = jax.random.split(key, 3)

    x = jax.random.normal(kx, (batch, seq, input_dim), dtype=jnp.float32)

    # nn.init.normal_(weight, 0, 0.01); bias = 0.  Stored transposed: (in, out).
    w1 = 0.01 * jax.random.normal(kw1, (input_dim, adapter_hidden_dim), jnp.float32)
    b1 = jnp.zeros((adapter_hidden_dim,), jnp.float32)
    w2 = 0.01 * jax.random.normal(kw2, (adapter_hidden_dim, input_dim), jnp.float32)
    b2 = jnp.zeros((input_dim,), jnp.float32)

    out = adapter_block(x, w1, b1, w2, b2)
    out = jax.block_until_ready(out)

    ref = reference(x, w1, b1, w2, b2)
    assert out.shape == x.shape and out.dtype == x.dtype
    assert jnp.allclose(out, ref, atol=1e-5, rtol=1e-5)

    # Multi-step grid with a partial trailing block (packed path, P=4):
    # N=1200 tokens -> Np=300 packed rows, tile 128 -> 3 steps, last masked.
    x_mid = jax.random.normal(kx, (2, 600, input_dim), dtype=jnp.float32)
    out_mid = jax.block_until_ready(adapter_block(x_mid, w1, b1, w2, b2, tile_m=128))
    assert jnp.allclose(out_mid, reference(x_mid, w1, b1, w2, b2), atol=1e-5, rtol=1e-5)

    # N not divisible by 4 -> P=1 fallback (no pad/slice), single full block.
    x_odd = jax.random.normal(kx, (3, 347, input_dim), dtype=jnp.float32)
    out_odd = jax.block_until_ready(adapter_block(x_odd, w1, b1, w2, b2))
    assert jnp.allclose(out_odd, reference(x_odd, w1, b1, w2, b2), atol=1e-5, rtol=1e-5)

    # P=1 fallback with multiple grid steps and a masked partial block.
    out_odd2 = jax.block_until_ready(adapter_block(x_odd, w1, b1, w2, b2, tile_m=256))
    assert jnp.allclose(out_odd2, reference(x_odd, w1, b1, w2, b2), atol=1e-5, rtol=1e-5)

    print("KERNEL_OK")
</pallas_src>

<mosaic_0001>
module attributes {stable_mosaic.version = 11 : i64} {
  func.func @adapter_kernel(%arg0: i32, %arg1: memref<4x128xf32, #tpu.memory_space<vmem>>, %arg2: memref<128x64xf32, #tpu.memory_space<vmem>>, %arg3: memref<1x64xf32, #tpu.memory_space<vmem>>, %arg4: memref<64x128xf32, #tpu.memory_space<vmem>>, %arg5: memref<1x128xf32, #tpu.memory_space<vmem>>, %arg6: memref<4x128xf32, #tpu.memory_space<vmem>>) attributes {dimension_semantics = [#tpu.dimension_semantics<parallel>], iteration_bounds = array<i64: 1>, scalar_prefetch = 0 : i64, scratch_operands = 0 : i64, tpu.core_type = #tpu.core_type<tc>, window_params = [{transform_indices = @transform_0, window_bounds = array<i64: 4, 128>}, {pipeline_mode = #tpu.pipeline_mode<synchronous>, transform_indices = @transform_1, window_bounds = array<i64: 128, 64>}, {pipeline_mode = #tpu.pipeline_mode<synchronous>, transform_indices = @transform_2, window_bounds = array<i64: 1, 64>}, {pipeline_mode = #tpu.pipeline_mode<synchronous>, transform_indices = @transform_3, window_bounds = array<i64: 64, 128>}, {pipeline_mode = #tpu.pipeline_mode<synchronous>, transform_indices = @transform_4, window_bounds = array<i64: 1, 128>}, {transform_indices = @transform_5, window_bounds = array<i64: 4, 128>}]} {
    %c0 = arith.constant 0 : index
    %c0_0 = arith.constant 0 : index
    %0 = vector.load %arg1[%c0, %c0_0] : memref<4x128xf32, #tpu.memory_space<vmem>>, vector<4x128xf32>
    %c0_1 = arith.constant 0 : index
    %c0_2 = arith.constant 0 : index
    %1 = vector.load %arg2[%c0_1, %c0_2] : memref<128x64xf32, #tpu.memory_space<vmem>>, vector<128x64xf32>
    %cst = arith.constant dense<0.000000e+00> : vector<4x64xf32>
    %2 = tpu.matmul %0, %1, %cst {dimension_numbers = #tpu.dot_dimension_numbers<[1], [0], [0], [1], [0, 0, 1, 1], [], []>} : vector<4x128xf32>, vector<128x64xf32>, vector<4x64xf32> -> vector<4x64xf32>
    %c0_3 = arith.constant 0 : index
    %c0_4 = arith.constant 0 : index
    %3 = vector.load %arg3[%c0_3, %c0_4] : memref<1x64xf32, #tpu.memory_space<vmem>>, vector<1x64xf32>
    %4 = vector.broadcast %3 : vector<1x64xf32> to vector<4x64xf32>
    %5 = arith.addf %2, %4 : vector<4x64xf32>
    %cst_5 = arith.constant 0.000000e+00 : f32
    %6 = vector.broadcast %cst_5 : f32 to vector<4x64xf32>
    %7 = arith.maximumf %5, %6 : vector<4x64xf32>
    %c0_6 = arith.constant 0 : index
    %c0_7 = arith.constant 0 : index
    %8 = vector.load %arg4[%c0_6, %c0_7] : memref<64x128xf32, #tpu.memory_space<vmem>>, vector<64x128xf32>
    %cst_8 = arith.constant dense<0.000000e+00> : vector<4x128xf32>
    %9 = tpu.matmul %7, %8, %cst_8 {dimension_numbers = #tpu.dot_dimension_numbers<[1], [0], [0], [1], [0, 0, 1, 1], [], []>} : vector<4x64xf32>, vector<64x128xf32>, vector<4x128xf32> -> vector<4x128xf32>
    %c0_9 = arith.constant 0 : index
    %c0_10 = arith.constant 0 : index
    %10 = vector.load %arg5[%c0_9, %c0_10] : memref<1x128xf32, #tpu.memory_space<vmem>>, vector<1x128xf32>
    %11 = vector.broadcast %10 : vector<1x128xf32> to vector<4x128xf32>
    %12 = arith.addf %9, %11 : vector<4x128xf32>
    %13 = arith.addf %0, %12 : vector<4x128xf32>
    %c0_11 = arith.constant 0 : index
    %c0_12 = arith.constant 0 : index
    %14 = vector.load %arg6[%c0_11, %c0_12] : memref<4x128xf32, #tpu.memory_space<vmem>>, vector<4x128xf32>
    tpu.vector_store %arg6[%c0_11, %c0_12], %13 {strides = array<i32>} : memref<4x128xf32, #tpu.memory_space<vmem>>, vector<4x128xf32>,
    return
  }
  func.func @transform_0(%arg0: i32) -> (i32, i32) {
    %c0_i32 = arith.constant 0 : i32
    %c0_i32_0 = arith.constant 0 : i32
    return %arg0, %c0_i32 : i32, i32
  }
  func.func @transform_1(%arg0: i32) -> (i32, i32) {
    %c0_i32 = arith.constant 0 : i32
    %c0_i32_0 = arith.constant 0 : i32
    %c0_i32_1 = arith.constant 0 : i32
    return %c0_i32, %c0_i32_0 : i32, i32
  }
  func.func @transform_2(%arg0: i32) -> (i32, i32) {
    %c0_i32 = arith.constant 0 : i32
    %c0_i32_0 = arith.constant 0 : i32
    %c0_i32_1 = arith.constant 0 : i32
    return %c0_i32, %c0_i32_0 : i32, i32
  }
  func.func @transform_3(%arg0: i32) -> (i32, i32) {
    %c0_i32 = arith.constant 0 : i32
    %c0_i32_0 = arith.constant 0 : i32
    %c0_i32_1 = arith.constant 0 : i32
    return %c0_i32, %c0_i32_0 : i32, i32
  }
  func.func @transform_4(%arg0: i32) -> (i32, i32) {
    %c0_i32 = arith.constant 0 : i32
    %c0_i32_0 = arith.constant 0 : i32
    %c0_i32_1 = arith.constant 0 : i32
    return %c0_i32, %c0_i32_0 : i32, i32
  }
  func.func @transform_5(%arg0: i32) -> (i32, i32) {
    %c0_i32 = arith.constant 0 : i32
    %c0_i32_0 = arith.constant 0 : i32
    return %arg0, %c0_i32 : i32, i32
  }
}

</mosaic_0001>

<llo_original>
// kernel: tile.13
$region0: #{tile.13}
  #allocation0 [shape = 's32[1]{0}', space=sflag, size = 0x4, scoped, tag = 'scoped memory for tile.13']
  %s0 = inlined_call_operand.vmem [shape: f32[16], index: 0, kind: input, shape index: {}]
  %s1 = inlined_call_operand.vmem [shape: f32[4,16], index: 1, kind: output, shape index: {}]
  // Predicated region
  $region2: #{tile.13} parent=0 // pred_check
    _
  $region3: #{tile.13} parent=0 // pred_check_branch
    %3 = sbr.rel (0) target = $region5
  $region4: #{tile.13} parent=0 // pred_region
    _
  $region5: #{tile.13} parent=0 // pred_fallthru
    _
  %v4 = vld [vmem:[%s0] ss:$0 sm:$0xff]
  %5 = vst [vmem:[%s1] sm:$0xf] %v4

// kernel: tile.14
$region0: #{tile.14}
  %s0 = inlined_call_operand.vmem [shape: f32[4,16], index: 0, kind: input, shape index: {}]
  %s1 = inlined_call_operand.vmem [shape: f32[1,64], index: 1, kind: output, shape index: {}]
  $region1: #{tile.14} parent=0
    #allocation0 [shape = 'u8[4096]{0}', space=vmem, size = 0x1000, scoped, tag = 'scoped mem for output reshape']
    #allocation1 [shape = 'u8[4096]{0}', space=vmem, size = 0x1000, scoped, tag = 'scoped mem for input reshape']
    %s3 = sshll.u32 1, 4
    %s4 = ssub.s32 %s3, 1
    %v5 = vld [vmem:[%s0] sm:%s4]
    %6 = vst [vmem:[#allocation1] sm:%s4] %v5
    %v7 = vld [vmem:[#allocation1] sm:$0x1]
    %vm8 = vcmask 130048
    %9 = vst.msk [vmem:[#allocation0] sm:$0x1] %vm8, %v7
    %s10 = scalar_lea.vmem [#allocation1], 3
    %v11 = vld [vmem:[%s10] sm:$0x1]
    %12 = vrot.lane.b32.xlu0 %v11, 48
    %v13 = vpop.permute.xlu0 %12
    %vm14 = vcmask 523648
    %15 = vst.msk [vmem:[#allocation0] sm:$0x1] %vm14, %v13
    %s16 = scalar_lea.vmem [#allocation1], 2
    %v17 = vld [vmem:[%s16] sm:$0x1]
    %18 = vrot.lane.b32.xlu0 %v17, 32
    %v19 = vpop.permute.xlu0 %18
    %vm20 = vcmask 392448
    %21 = vst.msk [vmem:[#allocation0] sm:$0x1] %vm20, %v19
    %s22 = scalar_lea.vmem [#allocation1], 1
    %v23 = vld [vmem:[%s22] sm:$0x1]
    %24 = vrot.lane.b32.xlu0 %v23, 16
    %v25 = vpop.permute.xlu0 %24
    %vm26 = vcmask 261248
    %27 = vst.msk [vmem:[#allocation0] sm:$0x1] %vm26, %v25
    %s29 = sshll.u32 1, 1
    %s30 = ssub.s32 %s29, 1
    %v32 = vld [vmem:[#allocation0] sm:%s30]
    %s33 = sshll.u32 1, 1
    %s34 = ssub.s32 %s33, 1
    %35 = vst [vmem:[%s1] sm:%s34] %v32

// kernel: tile.18
$region0: #{tile.18}
  #allocation0 [shape = 's32[1]{0}', space=sflag, size = 0x4, scoped, tag = 'scoped memory for tile.18']
  %s0 = inlined_call_operand.vmem [shape: f32[32], index: 0, kind: input, shape index: {}]
  %s1 = inlined_call_operand.vmem [shape: f32[4,32], index: 1, kind: output, shape index: {}]
  // Predicated region
  $region2: #{tile.18} parent=0 // pred_check
    _
  $region3: #{tile.18} parent=0 // pred_check_branch
    %3 = sbr.rel (0) target = $region5
  $region4: #{tile.18} parent=0 // pred_region
    _
  $region5: #{tile.18} parent=0 // pred_fallthru
    _
  %v4 = vld [vmem:[%s0] ss:$0 sm:$0xff]
  %5 = vst [vmem:[%s1] sm:$0xf] %v4

// kernel: tile.19
$region0: #{tile.19}
  %s0 = inlined_call_operand.vmem [shape: f32[4,32], index: 0, kind: input, shape index: {}]
  %s1 = inlined_call_operand.vmem [shape: f32[1,128], index: 1, kind: output, shape index: {}]
  $region1: #{tile.19} parent=0
    #allocation0 [shape = 'u8[4096]{0}', space=vmem, size = 0x1000, scoped, tag = 'scoped mem for output reshape']
    #allocation1 [shape = 'u8[4096]{0}', space=vmem, size = 0x1000, scoped, tag = 'scoped mem for input reshape']
    %s3 = sshll.u32 1, 4
    %s4 = ssub.s32 %s3, 1
    %v5 = vld [vmem:[%s0] sm:%s4]
    %6 = vst [vmem:[#allocation1] sm:%s4] %v5
    %v7 = vld [vmem:[#allocation1] sm:$0x1]
    %vm8 = vcmask 261120
    %9 = vst.msk [vmem:[#allocation0] sm:$0x1] %vm8, %v7
    %s10 = scalar_lea.vmem [#allocation1], 3
    %v11 = vld [vmem:[%s10] sm:$0x1]
    %12 = vrot.lane.b32.xlu0 %v11, 96
    %v13 = vpop.permute.xlu0 %12
    %vm14 = vcmask 1048320
    %15 = vst.msk [vmem:[#allocation0] sm:$0x1] %vm14, %v13
    %s16 = scalar_lea.vmem [#allocation1], 2
    %v17 = vld [vmem:[%s16] sm:$0x1]
    %18 = vrot.lane.b32.xlu0 %v17, 64
    %v19 = vpop.permute.xlu0 %18
    %vm20 = vcmask 785920
    %21 = vst.msk [vmem:[#allocation0] sm:$0x1] %vm20, %v19
    %s22 = scalar_lea.vmem [#allocation1], 1
    %v23 = vld [vmem:[%s22] sm:$0x1]
    %24 = vrot.lane.b32.xlu0 %v23, 32
    %v25 = vpop.permute.xlu0 %24
    %vm26 = vcmask 523520
    %27 = vst.msk [vmem:[#allocation0] sm:$0x1] %vm26, %v25
    %s29 = sshll.u32 1, 1
    %s30 = ssub.s32 %s29, 1
    %v32 = vld [vmem:[#allocation0] sm:%s30]
    %s33 = sshll.u32 1, 1
    %s34 = ssub.s32 %s33, 1
    %35 = vst [vmem:[%s1] sm:%s34] %v32

// kernel: adapter_block.1
$region0: #{adapter_block.1}
  #allocation0 [shape = 'u32[]', space=smem, size = 0x4, offset = 0x4, fixed_abs, tag = 'smem constant byte address 0x4 - core index']
  #allocation1 [shape = 'u32[144,128]{1,0:T(1,128)}', space=vmem, size = 0x12000, scoped, tag = 'internal scratch']
  %s0 = inlined_call_operand.vmem [shape: f32[4,128], index: 0, kind: input, shape index: {}]
  %s1 = inlined_call_operand.vmem [shape: f32[128,64], index: 1, kind: input, shape index: {}]
  %s2 = inlined_call_operand.vmem [shape: f32[1,64], index: 2, kind: input, shape index: {}]
  %s3 = inlined_call_operand.vmem [shape: f32[64,128], index: 3, kind: input, shape index: {}]
  %s4 = inlined_call_operand.vmem [shape: f32[1,128], index: 4, kind: input, shape index: {}]
  %s5 = inlined_call_operand.vmem [shape: f32[4,128], index: 5, kind: output, shape index: {}]
  %s6 = sld [smem:[#allocation0]]
  $region30: #{adapter_block.1} parent=0
    _
  %s8 = ssub.s32 1, %s6
  %s9 = scalar_select 0, %s8, %s6
  // Predicated region
  $region2: #{adapter_block.1} parent=0 // pred_check
    _
  $region3: #{adapter_block.1} parent=0 // pred_check_branch
    %11 = sbr.rel (0) target = $region5
  $region4: #{adapter_block.1} parent=0 // pred_region
    _
  $region5: #{adapter_block.1} parent=0 // pred_fallthru
    _
  // Predicated region
  $region6: #{adapter_block.1} parent=0 // pred_check
    _
  $region7: #{adapter_block.1} parent=0 // pred_check_branch
    %13 = sbr.rel (0) target = $region9
  $region8: #{adapter_block.1} parent=0 // pred_region
    _
  $region9: #{adapter_block.1} parent=0 // pred_fallthru
    _
  // Predicated region
  $region10: #{adapter_block.1} parent=0 // pred_check
    _
  $region11: #{adapter_block.1} parent=0 // pred_check_branch
    %15 = sbr.rel (0) target = $region13
  $region12: #{adapter_block.1} parent=0 // pred_region
    _
  $region13: #{adapter_block.1} parent=0 // pred_fallthru
    _
  // Predicated region
  $region14: #{adapter_block.1} parent=0 // pred_check
    _
  $region15: #{adapter_block.1} parent=0 // pred_check_branch
    %17 = sbr.rel (0) target = $region17
  $region16: #{adapter_block.1} parent=0 // pred_region
    _
  $region17: #{adapter_block.1} parent=0 // pred_fallthru
    _
  // Predicated region
  $region18: #{adapter_block.1} parent=0 // pred_check
    _
  $region19: #{adapter_block.1} parent=0 // pred_check_branch
    %19 = sbr.rel (0) target = $region21
  $region20: #{adapter_block.1} parent=0 // pred_region
    _
  $region21: #{adapter_block.1} parent=0 // pred_fallthru
    _
  %v20 = vld [vmem:[%s0] sm:$0xf]
  %v21 = vld [vmem:[%s1] sm:$0xff]
  %v22 = vld [vmem:[%s1 + $0x8] sm:$0xff]
  %v23 = vld [vmem:[%s1 + $0x10] sm:$0xff]
  %v24 = vld [vmem:[%s1 + $0x18] sm:$0xff]
  %v25 = vld [vmem:[%s1 + $0x20] sm:$0xff]
  %v26 = vld [vmem:[%s1 + $0x28] sm:$0xff]
  %v27 = vld [vmem:[%s1 + $0x30] sm:$0xff]
  %v28 = vld [vmem:[%s1 + $0x38] sm:$0xff]
  %v29 = vld [vmem:[%s1 + $0x40] sm:$0xff]
  %v30 = vld [vmem:[%s1 + $0x48] sm:$0xff]
  %v31 = vld [vmem:[%s1 + $0x50] sm:$0xff]
  %v32 = vld [vmem:[%s1 + $0x58] sm:$0xff]
  %v33 = vld [vmem:[%s1 + $0x60] sm:$0xff]
  %v34 = vld [vmem:[%s1 + $0x68] sm:$0xff]
  %v35 = vld [vmem:[%s1 + $0x70] sm:$0xff]
  %v36 = vld [vmem:[%s1 + $0x78] sm:$0xff]
  %v37 = vld [vmem:[%s2] sm:$0x1]
  %v39 = vlaneseq
  %v40 = vshrl.u32 %v39, 7
  %v41 = vsub.s32 0, %v40
  %v42 = vrot.slane %v37, %v41
  %44 = vmatprep.subr.mxu0 0.0
  %45 = vmatpush1.msra.mxu0 %v36
  %46 = vmatprep.subr.mxu0 0.0
  %47 = vmatpush1.msra.mxu0 %v35
  %48 = vmatprep.subr.mxu0 0.0
  %49 = vmatpush1.msra.mxu0 %v34
  %50 = vmatprep.subr.mxu0 0.0
  %51 = vmatpush1.msra.mxu0 %v33
  %52 = vmatprep.subr.mxu0 0.0
  %53 = vmatpush1.msra.mxu0 %v32
  %54 = vmatprep.subr.mxu0 0.0
  %55 = vmatpush1.msra.mxu0 %v31
  %56 = vmatprep.subr.mxu0 0.0
  %57 = vmatpush1.msra.mxu0 %v30
  %58 = vmatprep.subr.mxu0 0.0
  %59 = vmatpush1.msra.mxu0 %v29
  %60 = vmatprep.subr.mxu0 0.0
  %61 = vmatpush1.msra.mxu0 %v28
  %62 = vmatprep.subr.mxu0 0.0
  %63 = vmatpush1.msra.mxu0 %v27
  %64 = vmatprep.subr.mxu0 0.0
  %65 = vmatpush1.msra.mxu0 %v26
  %66 = vmatprep.subr.mxu0 0.0
  %67 = vmatpush1.msra.mxu0 %v25
  %68 = vmatprep.subr.mxu0 0.0
  %69 = vmatpush1.msra.mxu0 %v24
  %70 = vmatprep.subr.mxu0 0.0
  %71 = vmatpush1.msra.mxu0 %v23
  %72 = vmatprep.subr.mxu0 0.0
  %73 = vmatpush1.msra.mxu0 %v22
  %74 = vmatprep.subr.mxu0 0.0
  %75 = vmatpush1.msra.mxu0 %v21
  %76 = vmatprep.subr.mxu0 0.0
  %77 = vmatpush2.msra.mxu0 0.0
  %78 = vmatprep.subr.mxu0 0.0
  %79 = vmatpush2.msra.mxu0 0.0
  %80 = vmatprep.subr.mxu0 0.0
  %81 = vmatpush2.msra.mxu0 0.0
  %82 = vmatprep.subr.mxu0 0.0
  %83 = vmatpush2.msra.mxu0 0.0
  %84 = vmatprep.subr.mxu0 0.0
  %85 = vmatpush2.msra.mxu0 0.0
  %86 = vmatprep.subr.mxu0 0.0
  %87 = vmatpush2.msra.mxu0 0.0
  %88 = vmatprep.subr.mxu0 0.0
  %89 = vmatpush2.msra.mxu0 0.0
  %90 = vmatprep.subr.mxu0 0.0
  %91 = vmatpush2.msra.mxu0 0.0
  %92 = vmatprep.subr.mxu0 0.0
  %93 = vmatpush2.msra.mxu0 0.0
  %94 = vmatprep.subr.mxu0 0.0
  %95 = vmatpush2.msra.mxu0 0.0
  %96 = vmatprep.subr.mxu0 0.0
  %97 = vmatpush2.msra.mxu0 0.0
  %98 = vmatprep.subr.mxu0 0.0
  %99 = vmatpush2.msra.mxu0 0.0
  %100 = vmatprep.subr.mxu0 0.0
  %101 = vmatpush2.msra.mxu0 0.0
  %102 = vmatprep.subr.mxu0 0.0
  %103 = vmatpush2.msra.mxu0 0.0
  %104 = vmatprep.subr.mxu0 0.0
  %105 = vmatpush2.msra.mxu0 0.0
  %106 = vmatprep.subr.mxu0 0.0
  %107 = vmatpush2.msra.mxu0 0.0
  %108 = vmatprep.mubr.f32.mxu0 0.0
  %109 = vmatmul.mubr.f32.gmra.mxu0 %v20
  %v110 = vpop.f32.mrf.mxu0
  %v111 = vadd.f32 %v42, %v110
  %v112 = vpop.f32.mrf.mxu0
  %113 = vdwg.mxu0
  %v114 = vmax.f32 %v111, 0.0
  %v115 = vld [vmem:[%s3] sm:$0xff]
  %v116 = vld [vmem:[%s3 + $0x8] sm:$0xff]
  %v117 = vld [vmem:[%s3 + $0x10] sm:$0xff]
  %v118 = vld [vmem:[%s3 + $0x18] sm:$0xff]
  %v119 = vld [vmem:[%s3 + $0x20] sm:$0xff]
  %v120 = vld [vmem:[%s3 + $0x28] sm:$0xff]
  %v121 = vld [vmem:[%s3 + $0x30] sm:$0xff]
  %v122 = vld [vmem:[%s3 + $0x38] sm:$0xff]
  %v123 = vld [vmem:[%s4] sm:$0x1]
  %v125 = vlaneseq
  %v126 = vshrl.u32 %v125, 7
  %v127 = vsub.s32 0, %v126
  %v128 = vrot.slane %v123, %v127
  %vm130 = vcmask 523264
  %v132 = vsel %vm130, %v114, 0
  %134 = vmatprep.subr.mxu0 0.0
  %135 = vmatpush1.msra.mxu0 0.0
  %136 = vmatprep.subr.mxu0 0.0
  %137 = vmatpush1.msra.mxu0 0.0
  %138 = vmatprep.subr.mxu0 0.0
  %139 = vmatpush1.msra.mxu0 0.0
  %140 = vmatprep.subr.mxu0 0.0
  %141 = vmatpush1.msra.mxu0 0.0
  %142 = vmatprep.subr.mxu0 0.0
  %143 = vmatpush1.msra.mxu0 0.0
  %144 = vmatprep.subr.mxu0 0.0
  %145 = vmatpush1.msra.mxu0 0.0
  %146 = vmatprep.subr.mxu0 0.0
  %147 = vmatpush1.msra.mxu0 0.0
  %148 = vmatprep.subr.mxu0 0.0
  %149 = vmatpush1.msra.mxu0 0.0
  %150 = vmatprep.subr.mxu0 0.0
  %151 = vmatpush1.msra.mxu0 %v122
  %152 = vmatprep.subr.mxu0 0.0
  %153 = vmatpush1.msra.mxu0 %v121
  %154 = vmatprep.subr.mxu0 0.0
  %155 = vmatpush1.msra.mxu0 %v120
  %156 = vmatprep.subr.mxu0 0.0
  %157 = vmatpush1.msra.mxu0 %v119
  %158 = vmatprep.subr.mxu0 0.0
  %159 = vmatpush1.msra.mxu0 %v118
  %160 = vmatprep.subr.mxu0 0.0
  %161 = vmatpush1.msra.mxu0 %v117
  %162 = vmatprep.subr.mxu0 0.0
  %163 = vmatpush1.msra.mxu0 %v116
  %164 = vmatprep.subr.mxu0 0.0
  %165 = vmatpush1.msra.mxu0 %v115
  %166 = vmatprep.subr.mxu0 0.0
  %167 = vmatpush2.msra.mxu0 0.0
  %168 = vmatprep.subr.mxu0 0.0
  %169 = vmatpush2.msra.mxu0 0.0
  %170 = vmatprep.subr.mxu0 0.0
  %171 = vmatpush2.msra.mxu0 0.0
  %172 = vmatprep.subr.mxu0 0.0
  %173 = vmatpush2.msra.mxu0 0.0
  %174 = vmatprep.subr.mxu0 0.0
  %175 = vmatpush2.msra.mxu0 0.0
  %176 = vmatprep.subr.mxu0 0.0
  %177 = vmatpush2.msra.mxu0 0.0
  %178 = vmatprep.subr.mxu0 0.0
  %179 = vmatpush2.msra.mxu0 0.0
  %180 = vmatprep.subr.mxu0 0.0
  %181 = vmatpush2.msra.mxu0 0.0
  %182 = vmatprep.subr.mxu0 0.0
  %183 = vmatpush2.msra.mxu0 0.0
  %184 = vmatprep.subr.mxu0 0.0
  %185 = vmatpush2.msra.mxu0 0.0
  %186 = vmatprep.subr.mxu0 0.0
  %187 = vmatpush2.msra.mxu0 0.0
  %188 = vmatprep.subr.mxu0 0.0
  %189 = vmatpush2.msra.mxu0 0.0
  %190 = vmatprep.subr.mxu0 0.0
  %191 = vmatpush2.msra.mxu0 0.0
  %192 = vmatprep.subr.mxu0 0.0
  %193 = vmatpush2.msra.mxu0 0.0
  %194 = vmatprep.subr.mxu0 0.0
  %195 = vmatpush2.msra.mxu0 0.0
  %196 = vmatprep.subr.mxu0 0.0
  %197 = vmatpush2.msra.mxu0 0.0
  %198 = vmatprep.mubr.f32.mxu0 0.0
  %199 = vmatmul.mubr.f32.gmra.mxu0 %v132
  %v200 = vpop.f32.mrf.mxu0
  %v201 = vadd.f32 %v128, %v200
  %v202 = vpop.f32.mrf.mxu0
  %203 = vdwg.mxu0
  %v204 = vadd.f32 %v20, %v201
  %205 = vst [vmem:[%s5] sm:$0xf] %v204
  // Predicated region
  $region22: #{adapter_block.1} parent=0 // pred_check
    _
  $region23: #{adapter_block.1} parent=0 // pred_check_branch
    %207 = sbr.rel (0) target = $region25
  $region24: #{adapter_block.1} parent=0 // pred_region
    _
  $region25: #{adapter_block.1} parent=0 // pred_fallthru
    _
  // Predicated region
  $region26: #{adapter_block.1} parent=0 // pred_check
    _
  $region27: #{adapter_block.1} parent=0 // pred_check_branch
    %209 = sbr.rel (0) target = $region29
  $region28: #{adapter_block.1} parent=0 // pred_region
    _
  $region29: #{adapter_block.1} parent=0 // pred_fallthru
    _

</llo_original>
